<compile_context>
chip_gen: v5e
topology: v5e:2x2
jax: 0.10.0
libtpu: 0.0.40
codegen_flags: <defaults>
</compile_context>

<pallas_src>
import functools

import jax
import jax.numpy as jnp
from jax.experimental import pallas as pl
from jax.experimental.pallas import tpu as pltpu

_LANE = 128


def _weighted_bce_kernel(x_ref, y_ref, z_ref, lab_ref, out_ref, acc_ref, *,
                         n, tile_rows, tiles_per_core, has_pad):
    core = pl.program_id(0)          # "parallel" axis (split across TCs on v7x)
    k = pl.program_id(1)             # "arbitrary" reduction axis

    @pl.when(k == 0)
    def _():
        acc_ref[...] = jnp.zeros_like(acc_ref)

    lab = lab_ref[...].astype(jnp.float32)

    def bce(p_ref, alpha):
        # Matches torch.nn.BCELoss: each log term clamped at -100.
        # Two-term form kept so soft labels stay correct (kernel is HBM-bound,
        # so the extra log is hidden under the DMA).
        p = p_ref[...].astype(jnp.float32)
        logp = jnp.maximum(jnp.log(p), -100.0)
        log1mp = jnp.maximum(jnp.log(1.0 - p), -100.0)
        return alpha * -(lab * logp + (1.0 - lab) * log1mp)

    per = bce(x_ref, 0.3) + bce(y_ref, 0.4) + bce(z_ref, 0.3)

    if has_pad:
        # Mask off padded elements: global flat index >= n.  Skipped entirely
        # (at trace time) when N is already a multiple of the slab size.
        row0 = (core * tiles_per_core + k) * tile_rows
        rows = jax.lax.broadcasted_iota(jnp.int32, (tile_rows, _LANE), 0) + row0
        cols = jax.lax.broadcasted_iota(jnp.int32, (tile_rows, _LANE), 1)
        valid = (rows * _LANE + cols) < n
        per = jnp.where(valid, per, 0.0)

    # Per-lane partial sums: fold (tile_rows,128) -> (8,128) with pure VPU adds
    # (sums corresponding vregs; no cross-lane XLU work in the hot loop).
    acc_ref[...] += per.reshape(tile_rows // 8, 8, _LANE).sum(axis=0)

    @pl.when(k == pl.num_programs(1) - 1)
    def _():
        out_ref[...] = acc_ref[...].reshape(out_ref.shape)


def weighted_bce_loss(x, y, z, label, *, tile_rows=1024, num_cores=2):
    """Pallas implementation of the `loss` module forward pass.

    x, y, z: (N, 1) probabilities in (0, 1); label: (N,) (or any shape with N
    elements) targets.  Returns a scalar float32 equal to
    0.3*BCE(x,label) + 0.4*BCE(y,label) + 0.3*BCE(z,label).
    """
    n = int(x.size)
    assert int(y.size) == n and int(z.size) == n and int(label.size) == n

    # Lane-dense layout: pad N up to num_cores * tiles_per_core * tile_rows * 128.
    tile_rows = max(8, (int(tile_rows) // 8) * 8)          # (8,128) tiling rule
    rows_needed = -(-n // _LANE)
    rows_per_core = -(-rows_needed // num_cores)
    tile_rows = int(min(tile_rows, max(16, ((rows_per_core + 15) // 16) * 16)))
    tiles_per_core = -(-rows_per_core // tile_rows)
    total_rows = num_cores * tiles_per_core * tile_rows
    pad = total_rows * _LANE - n

    def prep(a, fill):
        a = a.reshape(-1)
        if pad:
            a = jnp.pad(a, (0, pad), constant_values=fill)
        return a.reshape(total_rows, _LANE)

    xp = prep(x, 0.5)      # safe pad value for probabilities (masked anyway)
    yp = prep(y, 0.5)
    zp = prep(z, 0.5)
    lp = prep(label.astype(jnp.float32), 0.0)

    data_spec = pl.BlockSpec((tile_rows, _LANE),
                             lambda i, k: (i * tiles_per_core + k, 0))

    out = pl.pallas_call(
        functools.partial(_weighted_bce_kernel, n=n, tile_rows=tile_rows,
                          tiles_per_core=tiles_per_core, has_pad=pad > 0),
        out_shape=jax.ShapeDtypeStruct((num_cores, 8, _LANE), jnp.float32),
        grid=(num_cores, tiles_per_core),
        in_specs=[data_spec, data_spec, data_spec, data_spec],
        out_specs=pl.BlockSpec((1, 8, _LANE), lambda i, k: (i, 0, 0)),
        scratch_shapes=[pltpu.VMEM((8, _LANE), jnp.float32)],
        compiler_params=pltpu.CompilerParams(
            dimension_semantics=("parallel", "arbitrary"),
            vmem_limit_bytes=32 * 1024 * 1024),
    )(xp, yp, zp, lp)

    # Single cheap reduce of the tiny (num_cores, 8, 128) partial sums.
    return jnp.sum(out) / n


if __name__ == "__main__":
    key = jax.random.PRNGKey(0)
    k1, k2, k3, k4 = jax.random.split(key, 4)
    N = 777  # deliberately not a multiple of 128 to exercise remainder masking

    x = jax.random.uniform(k1, (N, 1), jnp.float32, minval=0.05, maxval=0.95)
    y = jax.random.uniform(k2, (N, 1), jnp.float32, minval=0.05, maxval=0.95)
    z = jax.random.uniform(k3, (N, 1), jnp.float32, minval=0.05, maxval=0.95)
    label = (jax.random.uniform(k4, (N,)) > 0.5).astype(jnp.float32)

    result = weighted_bce_loss(x, y, z, label)
    jax.block_until_ready(result)

    # Pure-JAX reference (BCE with mean reduction, weighted sum).
    def bce_ref(p, t):
        logp = jnp.maximum(jnp.log(p), -100.0)
        log1mp = jnp.maximum(jnp.log(1.0 - p), -100.0)
        return jnp.mean(-(t * logp + (1.0 - t) * log1mp))

    t = label.reshape(-1, 1)
    ref = 0.3 * bce_ref(x, t) + 0.4 * bce_ref(y, t) + 0.3 * bce_ref(z, t)
    assert jnp.allclose(result, ref, rtol=1e-5, atol=1e-6), (result, ref)

    print("KERNEL_OK")
</pallas_src>

<mosaic_0001>
module attributes {stable_mosaic.version = 11 : i64} {
  func.func @_weighted_bce_kernel(%arg0: i32, %arg1: i32, %arg2: memref<16x128xf32, #tpu.memory_space<vmem>>, %arg3: memref<16x128xf32, #tpu.memory_space<vmem>>, %arg4: memref<16x128xf32, #tpu.memory_space<vmem>>, %arg5: memref<16x128xf32, #tpu.memory_space<vmem>>, %arg6: memref<1x8x128xf32, #tpu.memory_space<vmem>>, %arg7: memref<8x128xf32, #tpu.memory_space<vmem>>) attributes {dimension_semantics = [#tpu.dimension_semantics<parallel>, #tpu.dimension_semantics<arbitrary>], iteration_bounds = array<i64: 2, 1>, scalar_prefetch = 0 : i64, scratch_operands = 1 : i64, tpu.core_type = #tpu.core_type<tc>, window_params = [{transform_indices = @transform_0, window_bounds = array<i64: 16, 128>}, {transform_indices = @transform_1, window_bounds = array<i64: 16, 128>}, {transform_indices = @transform_2, window_bounds = array<i64: 16, 128>}, {transform_indices = @transform_3, window_bounds = array<i64: 16, 128>}, {transform_indices = @transform_4, window_bounds = array<i64: 1, 8, 128>}]} {
    %c0_i32 = arith.constant 0 : i32
    %0 = arith.cmpi eq, %arg1, %c0_i32 : i32
    %1 = arith.extui %0 : i1 to i32
    %c0_i32_0 = arith.constant 0 : i32
    %2 = arith.cmpi ne, %1, %c0_i32_0 : i32
    scf.if %2 {
      %cst_33 = arith.constant 0.000000e+00 : f32
      %82 = vector.broadcast %cst_33 : f32 to vector<8x128xf32>
      %c0_34 = arith.constant 0 : index
      %c0_35 = arith.constant 0 : index
      %83 = vector.load %arg7[%c0_34, %c0_35] : memref<8x128xf32, #tpu.memory_space<vmem>>, vector<8x128xf32>
      tpu.vector_store %arg7[%c0_34, %c0_35], %82 {strides = array<i32>} : memref<8x128xf32, #tpu.memory_space<vmem>>, vector<8x128xf32>,
    } else {
    }
    %c0 = arith.constant 0 : index
    %c0_1 = arith.constant 0 : index
    %3 = vector.load %arg5[%c0, %c0_1] : memref<16x128xf32, #tpu.memory_space<vmem>>, vector<16x128xf32>
    %c0_2 = arith.constant 0 : index
    %c0_3 = arith.constant 0 : index
    %4 = vector.load %arg2[%c0_2, %c0_3] : memref<16x128xf32, #tpu.memory_space<vmem>>, vector<16x128xf32>
    %5 = math.log %4 : vector<16x128xf32>
    %cst = arith.constant -1.000000e+02 : f32
    %6 = vector.broadcast %cst : f32 to vector<16x128xf32>
    %7 = arith.maximumf %5, %6 : vector<16x128xf32>
    %cst_4 = arith.constant 1.000000e+00 : f32
    %8 = vector.broadcast %cst_4 : f32 to vector<16x128xf32>
    %9 = arith.subf %8, %4 : vector<16x128xf32>
    %10 = math.log %9 : vector<16x128xf32>
    %cst_5 = arith.constant -1.000000e+02 : f32
    %11 = vector.broadcast %cst_5 : f32 to vector<16x128xf32>
    %12 = arith.maximumf %10, %11 : vector<16x128xf32>
    %13 = arith.mulf %3, %7 : vector<16x128xf32>
    %cst_6 = arith.constant 1.000000e+00 : f32
    %14 = vector.broadcast %cst_6 : f32 to vector<16x128xf32>
    %15 = arith.subf %14, %3 : vector<16x128xf32>
    %16 = arith.mulf %15, %12 : vector<16x128xf32>
    %17 = arith.addf %13, %16 : vector<16x128xf32>
    %cst_7 = arith.constant 0.000000e+00 : f32
    %18 = vector.broadcast %cst_7 : f32 to vector<16x128xf32>
    %19 = arith.subf %18, %17 : vector<16x128xf32>
    %cst_8 = arith.constant 3.000000e-01 : f32
    %20 = vector.broadcast %cst_8 : f32 to vector<16x128xf32>
    %21 = arith.mulf %20, %19 : vector<16x128xf32>
    %c0_9 = arith.constant 0 : index
    %c0_10 = arith.constant 0 : index
    %22 = vector.load %arg3[%c0_9, %c0_10] : memref<16x128xf32, #tpu.memory_space<vmem>>, vector<16x128xf32>
    %23 = math.log %22 : vector<16x128xf32>
    %cst_11 = arith.constant -1.000000e+02 : f32
    %24 = vector.broadcast %cst_11 : f32 to vector<16x128xf32>
    %25 = arith.maximumf %23, %24 : vector<16x128xf32>
    %cst_12 = arith.constant 1.000000e+00 : f32
    %26 = vector.broadcast %cst_12 : f32 to vector<16x128xf32>
    %27 = arith.subf %26, %22 : vector<16x128xf32>
    %28 = math.log %27 : vector<16x128xf32>
    %cst_13 = arith.constant -1.000000e+02 : f32
    %29 = vector.broadcast %cst_13 : f32 to vector<16x128xf32>
    %30 = arith.maximumf %28, %29 : vector<16x128xf32>
    %31 = arith.mulf %3, %25 : vector<16x128xf32>
    %cst_14 = arith.constant 1.000000e+00 : f32
    %32 = vector.broadcast %cst_14 : f32 to vector<16x128xf32>
    %33 = arith.subf %32, %3 : vector<16x128xf32>
    %34 = arith.mulf %33, %30 : vector<16x128xf32>
    %35 = arith.addf %31, %34 : vector<16x128xf32>
    %cst_15 = arith.constant 0.000000e+00 : f32
    %36 = vector.broadcast %cst_15 : f32 to vector<16x128xf32>
    %37 = arith.subf %36, %35 : vector<16x128xf32>
    %cst_16 = arith.constant 4.000000e-01 : f32
    %38 = vector.broadcast %cst_16 : f32 to vector<16x128xf32>
    %39 = arith.mulf %38, %37 : vector<16x128xf32>
    %40 = arith.addf %21, %39 : vector<16x128xf32>
    %c0_17 = arith.constant 0 : index
    %c0_18 = arith.constant 0 : index
    %41 = vector.load %arg4[%c0_17, %c0_18] : memref<16x128xf32, #tpu.memory_space<vmem>>, vector<16x128xf32>
    %42 = math.log %41 : vector<16x128xf32>
    %cst_19 = arith.constant -1.000000e+02 : f32
    %43 = vector.broadcast %cst_19 : f32 to vector<16x128xf32>
    %44 = arith.maximumf %42, %43 : vector<16x128xf32>
    %cst_20 = arith.constant 1.000000e+00 : f32
    %45 = vector.broadcast %cst_20 : f32 to vector<16x128xf32>
    %46 = arith.subf %45, %41 : vector<16x128xf32>
    %47 = math.log %46 : vector<16x128xf32>
    %cst_21 = arith.constant -1.000000e+02 : f32
    %48 = vector.broadcast %cst_21 : f32 to vector<16x128xf32>
    %49 = arith.maximumf %47, %48 : vector<16x128xf32>
    %50 = arith.mulf %3, %44 : vector<16x128xf32>
    %cst_22 = arith.constant 1.000000e+00 : f32
    %51 = vector.broadcast %cst_22 : f32 to vector<16x128xf32>
    %52 = arith.subf %51, %3 : vector<16x128xf32>
    %53 = arith.mulf %52, %49 : vector<16x128xf32>
    %54 = arith.addf %50, %53 : vector<16x128xf32>
    %cst_23 = arith.constant 0.000000e+00 : f32
    %55 = vector.broadcast %cst_23 : f32 to vector<16x128xf32>
    %56 = arith.subf %55, %54 : vector<16x128xf32>
    %cst_24 = arith.constant 3.000000e-01 : f32
    %57 = vector.broadcast %cst_24 : f32 to vector<16x128xf32>
    %58 = arith.mulf %57, %56 : vector<16x128xf32>
    %59 = arith.addf %40, %58 : vector<16x128xf32>
    %c1_i32 = arith.constant 1 : i32
    %60 = arith.muli %arg0, %c1_i32 : i32
    %61 = arith.addi %60, %arg1 : i32
    %c16_i32 = arith.constant 16 : i32
    %62 = arith.muli %61, %c16_i32 : i32
    %63 = tpu.iota {dimensions = array<i32: 0>} : vector<16x128xi32>
    %64 = vector.broadcast %62 : i32 to vector<16x128xi32>
    %65 = arith.addi %63, %64 : vector<16x128xi32>
    %66 = tpu.iota {dimensions = array<i32: 1>} : vector<16x128xi32>
    %c128_i32 = arith.constant 128 : i32
    %67 = vector.broadcast %c128_i32 : i32 to vector<16x128xi32>
    %68 = arith.muli %65, %67 : vector<16x128xi32>
    %69 = arith.addi %68, %66 : vector<16x128xi32>
    %c777_i32 = arith.constant 777 : i32
    %70 = vector.broadcast %c777_i32 : i32 to vector<16x128xi32>
    %71 = arith.cmpi slt, %69, %70 : vector<16x128xi32>
    %cst_25 = arith.constant 0.000000e+00 : f32
    %72 = vector.broadcast %cst_25 : f32 to vector<16x128xf32>
    %73 = arith.select %71, %59, %72 : vector<16x128xi1>, vector<16x128xf32>
    %c0_26 = arith.constant 0 : index
    %c0_27 = arith.constant 0 : index
    %74 = vector.load %arg7[%c0_26, %c0_27] : memref<8x128xf32, #tpu.memory_space<vmem>>, vector<8x128xf32>
    %75 = vector.shape_cast %73 : vector<16x128xf32> to vector<2x8x128xf32>
    %cst_28 = arith.constant dense<0.000000e+00> : vector<8x128xf32>
    %76 = vector.multi_reduction <add>, %75, %cst_28 [0] : vector<2x8x128xf32> to vector<8x128xf32>
    %77 = arith.addf %74, %76 : vector<8x128xf32>
    %c0_29 = arith.constant 0 : index
    %c0_30 = arith.constant 0 : index
    %78 = vector.load %arg7[%c0_29, %c0_30] : memref<8x128xf32, #tpu.memory_space<vmem>>, vector<8x128xf32>
    tpu.vector_store %arg7[%c0_29, %c0_30], %77 {strides = array<i32>} : memref<8x128xf32, #tpu.memory_space<vmem>>, vector<8x128xf32>,
    %c0_i32_31 = arith.constant 0 : i32
    %79 = arith.cmpi eq, %arg1, %c0_i32_31 : i32
    %80 = arith.extui %79 : i1 to i32
    %c0_i32_32 = arith.constant 0 : i32
    %81 = arith.cmpi ne, %80, %c0_i32_32 : i32
    scf.if %81 {
      %c0_33 = arith.constant 0 : index
      %c0_34 = arith.constant 0 : index
      %82 = vector.load %arg7[%c0_33, %c0_34] : memref<8x128xf32, #tpu.memory_space<vmem>>, vector<8x128xf32>
      %83 = vector.shape_cast %82 : vector<8x128xf32> to vector<1x8x128xf32>
      %c0_35 = arith.constant 0 : index
      %c0_36 = arith.constant 0 : index
      %c0_37 = arith.constant 0 : index
      %84 = vector.load %arg6[%c0_35, %c0_36, %c0_37] : memref<1x8x128xf32, #tpu.memory_space<vmem>>, vector<1x8x128xf32>
      tpu.vector_store %arg6[%c0_35, %c0_36, %c0_37], %83 {strides = array<i32>} : memref<1x8x128xf32, #tpu.memory_space<vmem>>, vector<1x8x128xf32>,
    } else {
    }
    return
  }
  func.func @transform_0(%arg0: i32, %arg1: i32) -> (i32, i32) {
    %c1_i32 = arith.constant 1 : i32
    %0 = arith.muli %arg0, %c1_i32 : i32
    %1 = arith.addi %0, %arg1 : i32
    %c0_i32 = arith.constant 0 : i32
    %c0_i32_0 = arith.constant 0 : i32
    return %1, %c0_i32 : i32, i32
  }
  func.func @transform_1(%arg0: i32, %arg1: i32) -> (i32, i32) {
    %c1_i32 = arith.constant 1 : i32
    %0 = arith.muli %arg0, %c1_i32 : i32
    %1 = arith.addi %0, %arg1 : i32
    %c0_i32 = arith.constant 0 : i32
    %c0_i32_0 = arith.constant 0 : i32
    return %1, %c0_i32 : i32, i32
  }
  func.func @transform_2(%arg0: i32, %arg1: i32) -> (i32, i32) {
    %c1_i32 = arith.constant 1 : i32
    %0 = arith.muli %arg0, %c1_i32 : i32
    %1 = arith.addi %0, %arg1 : i32
    %c0_i32 = arith.constant 0 : i32
    %c0_i32_0 = arith.constant 0 : i32
    return %1, %c0_i32 : i32, i32
  }
  func.func @transform_3(%arg0: i32, %arg1: i32) -> (i32, i32) {
    %c1_i32 = arith.constant 1 : i32
    %0 = arith.muli %arg0, %c1_i32 : i32
    %1 = arith.addi %0, %arg1 : i32
    %c0_i32 = arith.constant 0 : i32
    %c0_i32_0 = arith.constant 0 : i32
    return %1, %c0_i32 : i32, i32
  }
  func.func @transform_4(%arg0: i32, %arg1: i32) -> (i32, i32, i32) {
    %c0_i32 = arith.constant 0 : i32
    %c0_i32_0 = arith.constant 0 : i32
    %c0_i32_1 = arith.constant 0 : i32
    return %arg0, %c0_i32, %c0_i32_0 : i32, i32, i32
  }
}

</mosaic_0001>

<llo_original>
// kernel: tpu_custom_call.1
$region0: #{tpu_custom_call.1}
  #allocation0 [shape = 'u32[]', space=smem, size = 0x4, offset = 0x4, fixed_abs, tag = 'smem constant byte address 0x4 - core index']
  #allocation1 [shape = 'u32[72,128]{1,0:T(1,128)}', space=vmem, size = 0x9000, scoped, tag = 'internal scratch']
  #allocation2 [shape = 'f32[8,128]{1,0:T(8,128)}', space=vmem, size = 0x1000, scoped, tag = 'scratch operand']
  %s0 = inlined_call_operand.hbm [shape: f32[32,128], index: 0, kind: input, shape index: {}]
  %s1 = inlined_call_operand.hbm [shape: f32[32,128], index: 1, kind: input, shape index: {}]
  %s2 = inlined_call_operand.hbm [shape: f32[32,128], index: 2, kind: input, shape index: {}]
  %s3 = inlined_call_operand.hbm [shape: f32[32,128], index: 3, kind: input, shape index: {}]
  %s4 = inlined_call_operand.hbm [shape: f32[2,8,128], index: 4, kind: output, shape index: {}]
  %s5 = sld [smem:[#allocation0]]
  $region73: #{tpu_custom_call.1} parent=0
    _
  %s7 = ssub.s32 1, %s5
  %s8 = scalar_select 0, %s7, %s5
  $region1: #{tpu_custom_call.1} parent=0
    #allocation3 [shape = 'u8[16384]{0}', space=vmem, size = 0x4000, scoped, tag = 'input window, operand 0']
    #allocation4 [shape = 's32[2]{0}', space=sflag, size = 0x8, scoped, tag = 'scoped memory for tpu_custom_call.1']
    #allocation5 [shape = 's32[2]{0}', space=sflag, size = 0x8, scoped, tag = 'scoped memory for tpu_custom_call.1']
    #allocation6 [shape = 'u8[16384]{0}', space=vmem, size = 0x4000, scoped, tag = 'input window, operand 1']
    #allocation7 [shape = 's32[2]{0}', space=sflag, size = 0x8, scoped, tag = 'scoped memory for tpu_custom_call.1']
    #allocation8 [shape = 'u8[16384]{0}', space=vmem, size = 0x4000, scoped, tag = 'input window, operand 2']
    #allocation9 [shape = 'u8[16384]{0}', space=vmem, size = 0x4000, scoped, tag = 'input window, operand 3']
    #allocation10 [shape = 's32[2]{0}', space=sflag, size = 0x8, scoped, tag = 'scoped memory for tpu_custom_call.1']
    #allocation11 [shape = 'u8[8192]{0}', space=vmem, size = 0x2000, scoped, tag = 'output window, operand 0']
    %9 = vsyncpa [#allocation4], 0
    %s10 = scalar_lea.sflag [#allocation4], 1
    %11 = vsyncpa %s10, 0
    %12 = vsyncpa [#allocation7], 0
    %s13 = scalar_lea.sflag [#allocation7], 1
    %14 = vsyncpa %s13, 0
    %15 = vsyncpa [#allocation10], 0
    %s16 = scalar_lea.sflag [#allocation10], 1
    %17 = vsyncpa %s16, 0
    %18 = vsyncpa [#allocation5], 0
    %s19 = scalar_lea.sflag [#allocation5], 1
    %20 = vsyncpa %s19, 0
    loop: start=0, step=1, limit=4
    $region2: #{tpu_custom_call.1} parent=1 // loop_pre_header
      _
    $region3: #{tpu_custom_call.1} parent=1 // loop_header
      %s22 = sphi 0, %s26
      %p23 = scmp.ge.s32.totalorder %s22, 4
      %s29 = sphi 0, %s41
      %s30 = sphi 0, %s37
      %s31 = sphi 0, %s29
      %s32 = sphi 0, %s30
      %s33 = sphi 0, %s31
      %s34 = sphi 0, %s32
      %s46 = sphi 0, %s48
      %s49 = sphi 0, %s46
      %s50 = sphi 0, %s49
      %s66 = sphi 0, %s50
      %s74 = sphi 0, %s76
      %s77 = sphi 0, %s74
      %s78 = sphi 0, %s77
      %s94 = sphi 0, %s78
      %s102 = sphi 0, %s104
      %s105 = sphi 0, %s102
      %s106 = sphi 0, %s105
      %s122 = sphi 0, %s106
      %s130 = sphi 0, %s132
      %s133 = sphi 0, %s130
      %s134 = sphi 0, %s133
      %s150 = sphi 0, %s134
      %s156 = sphi 0, %s158
      %s159 = sphi 0, %s156
      %s160 = sphi 0, %s159
      %s176 = sphi 0, %s160
    $region4: #{tpu_custom_call.1} parent=1 // loop_header_branch
      %25 = sbr.rel (%p23) target = $region8
    $region5: #{tpu_custom_call.1} parent=1 // loop_body
      %s27 = ssub.s32 %s22, 1
      %s28 = ssub.s32 %s22, 2
      %s35 = sadd.s32 1, %s30
      %p36 = scmp.ge.s32.totalorder %s35, 1
      %s37 = scalar_select %p36, 0, %s35
      %s38 = sadd.s32 1, %s29
      %s39 = scalar_select %p36, %s38, %s29
      %p40 = scmp.ge.s32.totalorder %s39, 2
      %s41 = scalar_select %p40, 0, %s39
      %s42 = sadd.s32 %s29, %s30
      %s43 = sadd.s32 %s41, %s37
      %s44 = ssub.s32 %s42, %s43
      %p45 = scmp.eq.s32.totalorder %s44, 0
      %s47 = sadd.s32 %s46, 1
      %s48 = scalar_select %p45, %s46, %s47
      %p51 = pneg %p45
      %p52 = scmp.eq.s32.totalorder %s22, 1
      %p53 = por %p51, %p52
      %p54 = scmp.ne.s32.totalorder %s46, %s49
      %p55 = scmp.eq.s32.totalorder %s22, 0
      %p56 = por %p54, %p55
      %p57 = scmp.ne.s32.totalorder %s46, %s49
      %p58 = scmp.eq.s32.totalorder %s27, 1
      %p59 = por %p57, %p58
      %p60 = scmp.ne.s32.totalorder %s49, %s50
      %p61 = scmp.eq.s32.totalorder %s27, 0
      %p62 = por %p60, %p61
      %p63 = scmp.ne.s32.totalorder %s49, %s50
      %p64 = scmp.eq.s32.totalorder %s28, 1
      %p65 = por %p63, %p64
      %p67 = scmp.ne.s32.totalorder %s50, %s66
      %p68 = scmp.eq.s32.totalorder %s28, 0
      %p69 = por %p67, %p68
      %s70 = sadd.s32 %s29, %s30
      %s71 = sadd.s32 %s41, %s37
      %s72 = ssub.s32 %s70, %s71
      %p73 = scmp.eq.s32.totalorder %s72, 0
      %s75 = sadd.s32 %s74, 1
      %s76 = scalar_select %p73, %s74, %s75
      %p79 = pneg %p73
      %p80 = scmp.eq.s32.totalorder %s22, 1
      %p81 = por %p79, %p80
      %p82 = scmp.ne.s32.totalorder %s74, %s77
      %p83 = scmp.eq.s32.totalorder %s22, 0
      %p84 = por %p82, %p83
      %p85 = scmp.ne.s32.totalorder %s74, %s77
      %p86 = scmp.eq.s32.totalorder %s27, 1
      %p87 = por %p85, %p86
      %p88 = scmp.ne.s32.totalorder %s77, %s78
      %p89 = scmp.eq.s32.totalorder %s27, 0
      %p90 = por %p88, %p89
      %p91 = scmp.ne.s32.totalorder %s77, %s78
      %p92 = scmp.eq.s32.totalorder %s28, 1
      %p93 = por %p91, %p92
      %p95 = scmp.ne.s32.totalorder %s78, %s94
      %p96 = scmp.eq.s32.totalorder %s28, 0
      %p97 = por %p95, %p96
      %s98 = sadd.s32 %s29, %s30
      %s99 = sadd.s32 %s41, %s37
      %s100 = ssub.s32 %s98, %s99
      %p101 = scmp.eq.s32.totalorder %s100, 0
      %s103 = sadd.s32 %s102, 1
      %s104 = scalar_select %p101, %s102, %s103
      %p107 = pneg %p101
      %p108 = scmp.eq.s32.totalorder %s22, 1
      %p109 = por %p107, %p108
      %p110 = scmp.ne.s32.totalorder %s102, %s105
      %p111 = scmp.eq.s32.totalorder %s22, 0
      %p112 = por %p110, %p111
      %p113 = scmp.ne.s32.totalorder %s102, %s105
      %p114 = scmp.eq.s32.totalorder %s27, 1
      %p115 = por %p113, %p114
      %p116 = scmp.ne.s32.totalorder %s105, %s106
      %p117 = scmp.eq.s32.totalorder %s27, 0
      %p118 = por %p116, %p117
      %p119 = scmp.ne.s32.totalorder %s105, %s106
      %p120 = scmp.eq.s32.totalorder %s28, 1
      %p121 = por %p119, %p120
      %p123 = scmp.ne.s32.totalorder %s106, %s122
      %p124 = scmp.eq.s32.totalorder %s28, 0
      %p125 = por %p123, %p124
      %s126 = sadd.s32 %s29, %s30
      %s127 = sadd.s32 %s41, %s37
      %s128 = ssub.s32 %s126, %s127
      %p129 = scmp.eq.s32.totalorder %s128, 0
      %s131 = sadd.s32 %s130, 1
      %s132 = scalar_select %p129, %s130, %s131
      %p135 = pneg %p129
      %p136 = scmp.eq.s32.totalorder %s22, 1
      %p137 = por %p135, %p136
      %p138 = scmp.ne.s32.totalorder %s130, %s133
      %p139 = scmp.eq.s32.totalorder %s22, 0
      %p140 = por %p138, %p139
      %p141 = scmp.ne.s32.totalorder %s130, %s133
      %p142 = scmp.eq.s32.totalorder %s27, 1
      %p143 = por %p141, %p142
      %p144 = scmp.ne.s32.totalorder %s133, %s134
      %p145 = scmp.eq.s32.totalorder %s27, 0
      %p146 = por %p144, %p145
      %p147 = scmp.ne.s32.totalorder %s133, %s134
      %p148 = scmp.eq.s32.totalorder %s28, 1
      %p149 = por %p147, %p148
      %p151 = scmp.ne.s32.totalorder %s134, %s150
      %p152 = scmp.eq.s32.totalorder %s28, 0
      %p153 = por %p151, %p152
      %s154 = ssub.s32 %s29, %s41
      %p155 = scmp.eq.s32.totalorder %s154, 0
      %s157 = sadd.s32 %s156, 1
      %s158 = scalar_select %p155, %s156, %s157
      %p161 = pneg %p155
      %p162 = scmp.eq.s32.totalorder %s22, 1
      %p163 = por %p161, %p162
      %p164 = scmp.ne.s32.totalorder %s156, %s159
      %p165 = scmp.eq.s32.totalorder %s22, 0
      %p166 = por %p164, %p165
      %p167 = scmp.ne.s32.totalorder %s156, %s159
      %p168 = scmp.eq.s32.totalorder %s27, 1
      %p169 = por %p167, %p168
      %p170 = scmp.ne.s32.totalorder %s159, %s160
      %p171 = scmp.eq.s32.totalorder %s27, 0
      %p172 = por %p170, %p171
      %p173 = scmp.ne.s32.totalorder %s159, %s160
      %p174 = scmp.eq.s32.totalorder %s28, 1
      %p175 = por %p173, %p174
      %p177 = scmp.ne.s32.totalorder %s160, %s176
      %p178 = scmp.eq.s32.totalorder %s28, 0
      %p179 = por %p177, %p178
      %p180 = scmp.le.s32.totalorder 1, %s22
      %p181 = scmp.lt.s32.totalorder %s22, 3
      %p182 = pnand %p180, %p181
      %p183 = pneg %p182
      // Predicated region
      $region9: #{tpu_custom_call.1} parent=5 // pred_check
        _
      $region10: #{tpu_custom_call.1} parent=5 // pred_check_branch
        %185 = sbr.rel (%p182) target = $region12
      $region11: #{tpu_custom_call.1} parent=5 // pred_region
        %s186 = ssub.s32 %s22, 1
      $region12: #{tpu_custom_call.1} parent=5 // pred_fallthru
        _
      %p187 = scmp.lt.s32.totalorder %s22, 2
      // Predicated region
      $region13: #{tpu_custom_call.1} parent=5 // pred_check
        %p188 = pneg %p187
      $region14: #{tpu_custom_call.1} parent=5 // pred_check_branch
        %190 = sbr.rel (%p188) target = $region16
      $region15: #{tpu_custom_call.1} parent=5 // pred_region
        // Predicated region
        $region17: #{tpu_custom_call.1} parent=15 // pred_check
          %p191 = pneg %p56
        $region18: #{tpu_custom_call.1} parent=15 // pred_check_branch
          %193 = sbr.rel (%p191) target = $region20
        $region19: #{tpu_custom_call.1} parent=15 // pred_region
          %s194 = sand.u32 %s46, 1
          %s195 = scalar_lea.sflag [#allocation4], %s194
          %s196 = sand.u32 %s46, 1
          %s197 = smul.addr %s196, 16
          %s198 = scalar_lea.vmem [#allocation3], %s197
          %s199 = sadd.s32 %s29, %s30
          %s200 = smul.u32 2, %s199
          %202 = vsyncadd %s195, 0
          %s203 = smul.addr %s200, 8
          %s204 = scalar_lea.hbm %s0, %s203
          %s205 = sshll.u32 %s204, 4
          %s206 = int_to_ptr.hbm [resolvable:$true] %s205
          %s207 = sshll.u32 %s198, 4
          %s208 = int_to_ptr.vmem [resolvable:$true] %s207
          %213 = dma.hbm_to_vmem [thread:$0]  %s206, 256, %s208, %s195, 128, 128, 8
        $region20: #{tpu_custom_call.1} parent=15 // pred_fallthru
          _
        // Predicated region
        $region21: #{tpu_custom_call.1} parent=15 // pred_check
          %p214 = pneg %p84
        $region22: #{tpu_custom_call.1} parent=15 // pred_check_branch
          %216 = sbr.rel (%p214) target = $region24
        $region23: #{tpu_custom_call.1} parent=15 // pred_region
          %s217 = sand.u32 %s22, 1
          %s218 = scalar_lea.sflag [#allocation7], %s217
          %s219 = sand.u32 %s74, 1
          %s220 = smul.addr %s219, 16
          %s221 = scalar_lea.vmem [#allocation6], %s220
          %s222 = sadd.s32 %s29, %s30
          %s223 = smul.u32 2, %s222
          %225 = vsyncadd %s218, 0
          %s226 = smul.addr %s223, 8
          %s227 = scalar_lea.hbm %s1, %s226
          %s228 = sshll.u32 %s227, 4
          %s229 = int_to_ptr.hbm [resolvable:$true] %s228
          %s230 = sshll.u32 %s221, 4
          %s231 = int_to_ptr.vmem [resolvable:$true] %s230
          %236 = dma.hbm_to_vmem [thread:$0]  %s229, 256, %s231, %s218, 128, 128, 8
        $region24: #{tpu_custom_call.1} parent=15 // pred_fallthru
          _
        // Predicated region
        $region25: #{tpu_custom_call.1} parent=15 // pred_check
          %p237 = pneg %p112
        $region26: #{tpu_custom_call.1} parent=15 // pred_check_branch
          %239 = sbr.rel (%p237) target = $region28
        $region27: #{tpu_custom_call.1} parent=15 // pred_region
          %s240 = sand.u32 %s22, 1
          %s241 = scalar_lea.sflag [#allocation7], %s240
          %s242 = sand.u32 %s102, 1
          %s243 = smul.addr %s242, 16
          %s244 = scalar_lea.vmem [#allocation8], %s243
          %s245 = sadd.s32 %s29, %s30
          %s246 = smul.u32 2, %s245
          %248 = vsyncadd %s241, 0
          %s249 = smul.addr %s246, 8
          %s250 = scalar_lea.hbm %s2, %s249
          %s251 = sshll.u32 %s250, 4
          %s252 = int_to_ptr.hbm [resolvable:$true] %s251
          %s253 = sshll.u32 %s244, 4
          %s254 = int_to_ptr.vmem [resolvable:$true] %s253
          %259 = dma.hbm_to_vmem [thread:$0]  %s252, 256, %s254, %s241, 128, 128, 8
        $region28: #{tpu_custom_call.1} parent=15 // pred_fallthru
          _
        // Predicated region
        $region29: #{tpu_custom_call.1} parent=15 // pred_check
          %p260 = pneg %p140
        $region30: #{tpu_custom_call.1} parent=15 // pred_check_branch
          %262 = sbr.rel (%p260) target = $region32
        $region31: #{tpu_custom_call.1} parent=15 // pred_region
          %s263 = sand.u32 %s130, 1
          %s264 = scalar_lea.sflag [#allocation10], %s263
          %s265 = sand.u32 %s130, 1
          %s266 = smul.addr %s265, 16
          %s267 = scalar_lea.vmem [#allocation9], %s266
          %s268 = sadd.s32 %s29, %s30
          %s269 = smul.u32 2, %s268
          %271 = vsyncadd %s264, 0
          %s272 = smul.addr %s269, 8
          %s273 = scalar_lea.hbm %s3, %s272
          %s274 = sshll.u32 %s273, 4
          %s275 = int_to_ptr.hbm [resolvable:$true] %s274
          %s276 = sshll.u32 %s267, 4
          %s277 = int_to_ptr.vmem [resolvable:$true] %s276
          %282 = dma.hbm_to_vmem [thread:$0]  %s275, 256, %s277, %s264, 128, 128, 8
        $region32: #{tpu_custom_call.1} parent=15 // pred_fallthru
          _
      $region16: #{tpu_custom_call.1} parent=5 // pred_fallthru
        _
      %p283 = scmp.le.s32.totalorder 1, %s22
      %p284 = scmp.lt.s32.totalorder %s22, 3
      %p285 = pnand %p283, %p284
      %p286 = pneg %p285
      // Predicated region
      $region33: #{tpu_custom_call.1} parent=5 // pred_check
        _
      $region34: #{tpu_custom_call.1} parent=5 // pred_check_branch
        %288 = sbr.rel (%p285) target = $region36
      $region35: #{tpu_custom_call.1} parent=5 // pred_region
        %s289 = ssub.s32 %s22, 1
        %s290 = sand.u32 %s49, 1
        %s291 = scalar_lea.sflag [#allocation4], %s290
        %s292 = sand.u32 %s49, 1
        %s293 = smul.addr %s292, 16
        %s294 = scalar_lea.vmem [#allocation3], %s293
        // Predicated region
        $region37: #{tpu_custom_call.1} parent=35 // pred_check
          %p295 = pneg %p62
        $region38: #{tpu_custom_call.1} parent=35 // pred_check_branch
          %297 = sbr.rel (%p295) target = $region40
        $region39: #{tpu_custom_call.1} parent=35 // pred_region
          %299 = dma.done %s291, 256
        $region40: #{tpu_custom_call.1} parent=35 // pred_fallthru
          _
        %s300 = sand.u32 %s27, 1
        %s301 = scalar_lea.sflag [#allocation7], %s300
        %s302 = sand.u32 %s77, 1
        %s303 = smul.addr %s302, 16
        %s304 = scalar_lea.vmem [#allocation6], %s303
        // Predicated region
        $region41: #{tpu_custom_call.1} parent=35 // pred_check
          %p305 = pneg %p90
        $region42: #{tpu_custom_call.1} parent=35 // pred_check_branch
          %307 = sbr.rel (%p305) target = $region44
        $region43: #{tpu_custom_call.1} parent=35 // pred_region
          %309 = dma.done %s301, 256
        $region44: #{tpu_custom_call.1} parent=35 // pred_fallthru
          _
        %s310 = sand.u32 %s27, 1
        %s311 = scalar_lea.sflag [#allocation7], %s310
        %s312 = sand.u32 %s105, 1
        %s313 = smul.addr %s312, 16
        %s314 = scalar_lea.vmem [#allocation8], %s313
        // Predicated region
        $region45: #{tpu_custom_call.1} parent=35 // pred_check
          %p315 = pneg %p118
        $region46: #{tpu_custom_call.1} parent=35 // pred_check_branch
          %317 = sbr.rel (%p315) target = $region48
        $region47: #{tpu_custom_call.1} parent=35 // pred_region
          %319 = dma.done %s311, 256
        $region48: #{tpu_custom_call.1} parent=35 // pred_fallthru
          _
        %s320 = sand.u32 %s133, 1
        %s321 = scalar_lea.sflag [#allocation10], %s320
        %s322 = sand.u32 %s133, 1
        %s323 = smul.addr %s322, 16
        %s324 = scalar_lea.vmem [#allocation9], %s323
        // Predicated region
        $region49: #{tpu_custom_call.1} parent=35 // pred_check
          %p325 = pneg %p146
        $region50: #{tpu_custom_call.1} parent=35 // pred_check_branch
          %327 = sbr.rel (%p325) target = $region52
        $region51: #{tpu_custom_call.1} parent=35 // pred_region
          %329 = dma.done %s321, 256
        $region52: #{tpu_custom_call.1} parent=35 // pred_fallthru
          _
        %s330 = sand.u32 %s49, 1
        %s331 = scalar_lea.sflag [#allocation4], %s330
        %s332 = sand.u32 %s49, 1
        %s333 = smul.addr %s332, 16
        %s334 = scalar_lea.vmem [#allocation3], %s333
        %p335 = pneg %p62
        %p336 = pneg %p59
        %s337 = sand.u32 %s27, 1
        %s338 = scalar_lea.sflag [#allocation7], %s337
        %s339 = sand.u32 %s77, 1
        %s340 = smul.addr %s339, 16
        %s341 = scalar_lea.vmem [#allocation6], %s340
        %p342 = pneg %p90
        %p343 = pneg %p87
        %s344 = sand.u32 %s27, 1
        %s345 = scalar_lea.sflag [#allocation7], %s344
        %s346 = sand.u32 %s105, 1
        %s347 = smul.addr %s346, 16
        %s348 = scalar_lea.vmem [#allocation8], %s347
        %p349 = pneg %p118
        %p350 = pneg %p115
        %s351 = sand.u32 %s133, 1
        %s352 = scalar_lea.sflag [#allocation10], %s351
        %s353 = sand.u32 %s133, 1
        %s354 = smul.addr %s353, 16
        %s355 = scalar_lea.vmem [#allocation9], %s354
        %p356 = pneg %p146
        %p357 = pneg %p143
        %p358 = pneg %p172
        %p359 = pneg %p169
        %s360 = sand.u32 %s159, 1
        %s361 = scalar_lea.sflag [#allocation5], %s360
        %s362 = sand.u32 %s159, 1
        %s363 = smul.addr %s362, 8
        %s364 = scalar_lea.vmem [#allocation11], %s363
        %s365 = sadd.s32 %s31, %s32
        %s366 = smul.u32 2, %s365
        %s367 = sadd.s32 %s31, %s32
        %s368 = smul.u32 2, %s367
        %s369 = sadd.s32 %s31, %s32
        %s370 = smul.u32 2, %s369
        %s371 = sadd.s32 %s31, %s32
        %s372 = smul.u32 2, %s371
        %p373 = scmp.eq.s32.totalorder %s32, 0
        // Predicated region
        $region53: #{tpu_custom_call.1} parent=35 // pred_check
          %p374 = pneg %p373
        $region54: #{tpu_custom_call.1} parent=35 // pred_check_branch
          %376 = sbr.rel (%p374) target = $region56
        $region55: #{tpu_custom_call.1} parent=35 // pred_region
          %377 = vst [vmem:[#allocation2] sm:$0xff] 0.0
        $region56: #{tpu_custom_call.1} parent=35 // pred_fallthru
          _
        %v378 = vld [vmem:[%s324] sm:$0xff]
        %v379 = vld [vmem:[%s324 + $0x8] sm:$0xff]
        %v380 = vld [vmem:[%s294] sm:$0xff]
        %v381 = vld [vmem:[%s294 + $0x8] sm:$0xff]
        %v382 = vlog2.pop %v380
        %v383 = vmul.f32 %v382, 0.6931472
        %v384 = vlog2.pop %v381
        %v385 = vmul.f32 %v384, 0.6931472
        %v386 = vmax.f32 %v383, -100.0
        %v387 = vmax.f32 %v385, -100.0
        %v388 = vsub.f32 1.0, %v380
        %v389 = vsub.f32 1.0, %v381
        %v390 = vlog2.pop %v388
        %v391 = vmul.f32 %v390, 0.6931472
        %v392 = vlog2.pop %v389
        %v393 = vmul.f32 %v392, 0.6931472
        %v394 = vmax.f32 %v391, -100.0
        %v395 = vmax.f32 %v393, -100.0
        %v396 = vmul.f32 %v378, %v386
        %v397 = vmul.f32 %v379, %v387
        %v398 = vsub.f32 1.0, %v378
        %v399 = vsub.f32 1.0, %v379
        %v400 = vmul.f32 %v398, %v394
        %v401 = vmul.f32 %v399, %v395
        %v402 = vadd.f32 %v396, %v400
        %v403 = vadd.f32 %v397, %v401
        %v404 = vsub.f32 0.0, %v402
        %v405 = vsub.f32 0.0, %v403
        %v406 = vmul.f32 %v404, 0.3
        %v407 = vmul.f32 %v405, 0.3
        %v408 = vld [vmem:[%s304] sm:$0xff]
        %v409 = vld [vmem:[%s304 + $0x8] sm:$0xff]
        %v410 = vlog2.pop %v408
        %v411 = vmul.f32 %v410, 0.6931472
        %v412 = vlog2.pop %v409
        %v413 = vmul.f32 %v412, 0.6931472
        %v414 = vmax.f32 %v411, -100.0
        %v415 = vmax.f32 %v413, -100.0
        %v416 = vsub.f32 1.0, %v408
        %v417 = vsub.f32 1.0, %v409
        %v418 = vlog2.pop %v416
        %v419 = vmul.f32 %v418, 0.6931472
        %v420 = vlog2.pop %v417
        %v421 = vmul.f32 %v420, 0.6931472
        %v422 = vmax.f32 %v419, -100.0
        %v423 = vmax.f32 %v421, -100.0
        %v424 = vmul.f32 %v378, %v414
        %v425 = vmul.f32 %v379, %v415
        %v426 = vmul.f32 %v398, %v422
        %v427 = vmul.f32 %v399, %v423
        %v428 = vadd.f32 %v424, %v426
        %v429 = vadd.f32 %v425, %v427
        %v430 = vsub.f32 0.0, %v428
        %v431 = vsub.f32 0.0, %v429
        %v432 = vmul.f32 %v430, 0.4
        %v433 = vmul.f32 %v431, 0.4
        %v434 = vadd.f32 %v406, %v432
        %v435 = vadd.f32 %v407, %v433
        %v436 = vld [vmem:[%s314] sm:$0xff]
        %v437 = vld [vmem:[%s314 + $0x8] sm:$0xff]
        %v438 = vlog2.pop %v436
        %v439 = vmul.f32 %v438, 0.6931472
        %v440 = vlog2.pop %v437
        %v441 = vmul.f32 %v440, 0.6931472
        %v442 = vmax.f32 %v439, -100.0
        %v443 = vmax.f32 %v441, -100.0
        %v444 = vsub.f32 1.0, %v436
        %v445 = vsub.f32 1.0, %v437
        %v446 = vlog2.pop %v444
        %v447 = vmul.f32 %v446, 0.6931472
        %v448 = vlog2.pop %v445
        %v449 = vmul.f32 %v448, 0.6931472
        %v450 = vmax.f32 %v447, -100.0
        %v451 = vmax.f32 %v449, -100.0
        %v452 = vmul.f32 %v378, %v442
        %v453 = vmul.f32 %v379, %v443
        %v454 = vmul.f32 %v398, %v450
        %v455 = vmul.f32 %v399, %v451
        %v456 = vadd.f32 %v452, %v454
        %v457 = vadd.f32 %v453, %v455
        %v458 = vsub.f32 0.0, %v456
        %v459 = vsub.f32 0.0, %v457
        %v460 = vmul.f32 %v458, 0.3
        %v461 = vmul.f32 %v459, 0.3
        %v462 = vadd.f32 %v434, %v460
        %v463 = vadd.f32 %v435, %v461
        %s464 = sadd.s32 %s31, %s32
        %s465 = smul.u32 %s464, 16
        %v466 = vlaneseq
        %v467 = vshrl.u32 %v466, 7
        %v468 = vadd.s32 %v467, 8
        %v469 = vstv %s465
        %v470 = vadd.s32 %v467, %v469
        %v471 = vadd.s32 %v468, %v469
        %v472 = vlaneseq
        %v473 = vand.u32 %v472, 127
        %v474 = vmul.u32 %v470, 128
        %v475 = vmul.u32 %v471, 128
        %v476 = vadd.s32 %v474, %v473
        %v477 = vadd.s32 %v475, %v473
        %vm478 = vcmp.lt.s32.totalorder %v476, 777
        %vm479 = vcmp.lt.s32.totalorder %v477, 777
        %v480 = vsel %vm478, %v462, 0.0
        %v481 = vsel %vm479, %v463, 0.0
        %v482 = vld [vmem:[#allocation2] sm:$0xff]
        %v483 = vadd.f32 %v480, %v481
        %v484 = vadd.f32 %v482, %v483
        %485 = vst [vmem:[#allocation2] sm:$0xff] %v484
        // Predicated region
        $region57: #{tpu_custom_call.1} parent=35 // pred_check
          %p486 = pneg %p373
        $region58: #{tpu_custom_call.1} parent=35 // pred_check_branch
          %488 = sbr.rel (%p486) target = $region60
        $region59: #{tpu_custom_call.1} parent=35 // pred_region
          %v489 = vld [vmem:[#allocation2] sm:$0xff]
          %490 = vst [vmem:[%s364] sm:$0xff] %v489
        $region60: #{tpu_custom_call.1} parent=35 // pred_fallthru
          _
        %s491 = sand.u32 %s159, 1
        %s492 = scalar_lea.sflag [#allocation5], %s491
        %s493 = sand.u32 %s159, 1
        %s494 = smul.addr %s493, 8
        %s495 = scalar_lea.vmem [#allocation11], %s494
        // Predicated region
        $region61: #{tpu_custom_call.1} parent=35 // pred_check
          %p496 = pneg %p169
        $region62: #{tpu_custom_call.1} parent=35 // pred_check_branch
          %498 = sbr.rel (%p496) target = $region64
        $region63: #{tpu_custom_call.1} parent=35 // pred_region
          %500 = vsyncadd %s492, 0
          %s501 = smul.addr %s31, 8
          %s502 = scalar_lea.hbm %s4, %s501
          %s504 = sshll.u32 %s495, 4
          %s505 = int_to_ptr.vmem [resolvable:$true] %s504
          %s506 = sshll.u32 %s502, 4
          %s507 = int_to_ptr.hbm [resolvable:$true] %s506
          %509 = dma.vmem_to_hbm [thread:$0]  %s505, 128, %s507, %s492
        $region64: #{tpu_custom_call.1} parent=35 // pred_fallthru
          _
      $region36: #{tpu_custom_call.1} parent=5 // pred_fallthru
        _
      %p510 = scmp.le.s32.totalorder 2, %s22
      // Predicated region
      $region65: #{tpu_custom_call.1} parent=5 // pred_check
        %p511 = pneg %p510
      $region66: #{tpu_custom_call.1} parent=5 // pred_check_branch
        %513 = sbr.rel (%p511) target = $region68
      $region67: #{tpu_custom_call.1} parent=5 // pred_region
        %s514 = ssub.s32 %s22, 2
        // Predicated region
        $region69: #{tpu_custom_call.1} parent=67 // pred_check
          %p515 = pneg %p175
        $region70: #{tpu_custom_call.1} parent=67 // pred_check_branch
          %517 = sbr.rel (%p515) target = $region72
        $region71: #{tpu_custom_call.1} parent=67 // pred_region
          %s518 = sand.u32 %s160, 1
          %s519 = scalar_lea.sflag [#allocation5], %s518
          %s520 = sand.u32 %s160, 1
          %s521 = smul.addr %s520, 8
          %s522 = scalar_lea.vmem [#allocation11], %s521
          %524 = dma.done %s519, 128
        $region72: #{tpu_custom_call.1} parent=67 // pred_fallthru
          _
      $region68: #{tpu_custom_call.1} parent=5 // pred_fallthru
        _
    $region6: #{tpu_custom_call.1} parent=1 // loop_footer
      %s26 = sadd.s32 1, %s22
    $region7: #{tpu_custom_call.1} parent=1 // loop_footer_branch
      %21 = sbr.rel target = $region3
    $region8: #{tpu_custom_call.1} parent=1 // loop_exit
      _
    %525 = vsyncpa [#allocation4], 1
    %s526 = scalar_lea.sflag [#allocation4], 1
    %527 = vsyncpa %s526, 1
    %528 = vsyncpa [#allocation7], 1
    %s529 = scalar_lea.sflag [#allocation7], 1
    %530 = vsyncpa %s529, 1
    %531 = vsyncpa [#allocation10], 1
    %s532 = scalar_lea.sflag [#allocation10], 1
    %533 = vsyncpa %s532, 1
    %534 = vsyncpa [#allocation5], 1
    %s535 = scalar_lea.sflag [#allocation5], 1
    %536 = vsyncpa %s535, 1

</llo_original>
